<compile_context>
chip_gen: v7x
topology: tpu7x:2x2x1
jax: 0.10.0
libtpu: 0.0.40
codegen_flags: <defaults>
</compile_context>

<pallas_src>
import functools
import math

import jax
import jax.numpy as jnp
from jax.experimental import pallas as pl
from jax.experimental.pallas import tpu as pltpu


_MIN_VMEM_LIMIT = 32 * 1024 * 1024


def _vmem_budget_bytes():
    """Physical VMEM per TensorCore (v5e/v6e: 128 MiB, v7x: 64 MiB)."""
    try:
        return int(pltpu.get_tpu_info().vmem_capacity_bytes)
    except Exception:
        return 64 * 1024 * 1024  # conservative (v7x-sized) fallback


def _vmem_limit(estimate_bytes, budget_bytes):
    """Scoped-VMEM limit from the working-set estimate, clipped to the budget."""
    hi = int(0.9 * budget_bytes)
    return min(hi, max(_MIN_VMEM_LIMIT, int(2 * estimate_bytes)))


def _pick_tile(size, pref, lane=False):
    """Largest tile <= pref that divides `size` (8-sublane / 128-lane friendly)."""
    if size <= pref:
        return size
    step = 128 if lane else 8
    for t in range(pref, 0, -1):
        if size % t == 0 and t % step == 0:
            return t
    return size  # ragged fallback: single full-size tile


def _pick_head_group(n_heads, d_k, max_group):
    """Largest divisor g of n_heads with g <= max_group whose lane width g*d_k is
    either the full d_model slab (g == n_heads) or a multiple of 128."""
    ok = [g for g in range(1, n_heads + 1)
          if n_heads % g == 0 and (g == n_heads or (g * d_k) % 128 == 0)]
    under = [g for g in ok if g <= max_group]
    return max(under) if under else min(ok)


def _attn_vmem_bytes(hg, tq, tk, d_k):
    """Rough attention-kernel working set for a head group of size hg."""
    score_tmp = 3 * hg * tq * tk * 4                      # s, p + one live temp (f32)
    acc = hg * tq * d_k * 4                               # f32 numerator scratch
    stats = 2 * hg * tq * 128 * 4                         # m/l scratch (lane-padded)
    tiles = 2 * (hg * tq * d_k + 2 * hg * tk * d_k) * 2   # dbl-buffered bf16 q/k/v
    out = 2 * tq * hg * d_k * 2                           # dbl-buffered bf16 ctx block
    return score_tmp + acc + stats + tiles + out


# ---------------------------------------------------------------------------
# Kernel 1: head-grouped Q/K/V projections, written head-major (B, H, S, d_k).
# Grid: (batch, head_group, seq_tile).  1/sqrt(d_k) folded into Q.
# ---------------------------------------------------------------------------
def _qkv_proj_kernel(q_ref, k_ref, v_ref,
                     wq_ref, bq_ref, wk_ref, bk_ref, wv_ref, bv_ref,
                     qo_ref, ko_ref, vo_ref, *, scale, d_k):
    # x: (TS, D) bf16; w: (D, HC*d_k) bf16; b: (1, HC*d_k) f32;
    # out refs: (HC, TS, d_k) bf16 slabs of the head-major arrays.
    def project(x_ref, w_ref, b_ref, o_ref, s):
        y = jnp.dot(x_ref[...], w_ref[...],
                    preferred_element_type=jnp.float32) + b_ref[...]
        if s != 1.0:
            y = y * s
        for h in range(o_ref.shape[0]):           # static per-head lane slices
            o_ref[h] = y[:, h * d_k:(h + 1) * d_k].astype(o_ref.dtype)

    project(q_ref, wq_ref, bq_ref, qo_ref, scale)   # fold 1/sqrt(d_k) into Q
    project(k_ref, wk_ref, bk_ref, ko_ref, 1.0)
    project(v_ref, wv_ref, bv_ref, vo_ref, 1.0)


# ---------------------------------------------------------------------------
# Kernel 2: head-grouped flash attention; writes the concatenated context
# (B, S, D) directly (no (H, TQ, D) temporary, no W_o in this kernel).
# Grid: (batch, head_group, q_tile, kv_tile); kv_tile is the reduction axis.
# ---------------------------------------------------------------------------
def _attn_kernel(qp_ref, kp_ref, vp_ref, ctx_ref, m_sc, l_sc, acc_sc, *, d_k):
    ki = pl.program_id(3)

    @pl.when(ki == 0)
    def _():
        m_sc[...] = jnp.full_like(m_sc, -jnp.inf)
        l_sc[...] = jnp.zeros_like(l_sc)
        acc_sc[...] = jnp.zeros_like(acc_sc)

    q = qp_ref[...]            # (HG, TQ, d_k) bf16, pre-scaled by 1/sqrt(d_k)
    k = kp_ref[...]            # (HG, TK, d_k) bf16

    # Head-batched Q.K^T on the MXU (bf16 in, f32 out) — no explicit transpose.
    s = jnp.einsum('hqd,hkd->hqk', q, k,
                   preferred_element_type=jnp.float32)    # (HG, TQ, TK) f32

    m_prev = m_sc[...]
    m_new = jnp.maximum(m_prev, jnp.max(s, axis=-1, keepdims=True))
    alpha = jnp.exp(m_prev - m_new)
    p = jnp.exp(s - m_new)
    l_sc[...] = alpha * l_sc[...] + jnp.sum(p, axis=-1, keepdims=True)
    acc_sc[...] = alpha * acc_sc[...] + jnp.einsum(
        'hqk,hkd->hqd', p.astype(vp_ref.dtype), vp_ref[...],
        preferred_element_type=jnp.float32)
    m_sc[...] = m_new

    @pl.when(ki == pl.num_programs(3) - 1)
    def _():
        av = acc_sc[...] / l_sc[...]          # exact divide; epilogue runs once
        for h in range(av.shape[0]):          # static per-head lane-slice stores
            ctx_ref[:, h * d_k:(h + 1) * d_k] = av[h].astype(ctx_ref.dtype)


# ---------------------------------------------------------------------------
# Kernel 3: lane-dense output projection  (B*S, D) @ (D, D) + b_o.
# Grid: (row_tile, col_tile); full-D contraction per step.
# ---------------------------------------------------------------------------
def _out_proj_kernel(x_ref, w_ref, b_ref, o_ref):
    y = jnp.dot(x_ref[...], w_ref[...], preferred_element_type=jnp.float32)
    o_ref[...] = (y + b_ref[...]).astype(o_ref.dtype)


def mha_forward(q, k, v, params, *, n_heads,
                seq_tile=None, q_tile=None, kv_tile=None, out_tile=None):
    """q, k, v: (B, S, D). params: weights (D, D) in `x @ W + b` layout, biases (1, D)."""
    B, S, D = q.shape
    H = n_heads
    assert D % H == 0, "d_model must be divisible by n_heads"
    d_k = D // H
    scale = 1.0 / math.sqrt(d_k)
    out_dtype = q.dtype
    cdt = jnp.bfloat16                      # MXU-native compute dtype

    # Generation-aware tiling / VMEM budgets (v5e/v6e: 128 MiB, v7x: 64 MiB).
    budget = _vmem_budget_bytes()
    big_vmem = budget >= 100 * 1024 * 1024
    if seq_tile is None:
        seq_tile = 512 if big_vmem else 256
    if q_tile is None:
        q_tile = 512 if big_vmem else 256
    if kv_tile is None:
        kv_tile = 512 if big_vmem else 256
    if out_tile is None:
        out_tile = 512 if big_vmem else 256

    TS = _pick_tile(S, seq_tile)
    TQ = _pick_tile(S, q_tile)
    TK = _pick_tile(S, kv_tile)

    # bf16 MXU operands (one-time host-side casts); biases stay f32.
    qx, kx, vx = (t.astype(cdt) for t in (q, k, v))
    wq, wk, wv, wo = (params[n].astype(cdt) for n in ("wq", "wk", "wv", "wo"))
    bq, bk, bv, bo = (params[n].astype(jnp.float32)
                      for n in ("bq", "bk", "bv", "bo"))

    # ---- call 1: head-grouped Q/K/V projections, head-major output ----------
    HC = _pick_head_group(H, d_k, max(1, 256 // d_k))   # MXU N >= 256 when possible
    grid1 = (B, H // HC, S // TS)                       # head group OUTER, seq inner
    x_spec = pl.BlockSpec((pl.Squeezed(), TS, D), lambda b, hg, si: (b, si, 0))
    w_spec = pl.BlockSpec((D, HC * d_k), lambda b, hg, si: (0, hg))
    b_spec = pl.BlockSpec((1, HC * d_k), lambda b, hg, si: (0, hg))
    proj_out_spec = pl.BlockSpec((pl.Squeezed(), HC, TS, d_k),
                                 lambda b, hg, si: (b, hg, si, 0))
    head_shape = jax.ShapeDtypeStruct((B, H, S, d_k), cdt)

    proj_est = (2 * (3 * TS * D * 2 + 3 * D * HC * d_k * 2 + 3 * HC * d_k * 4
                     + 3 * HC * TS * d_k * 2) + 3 * TS * HC * d_k * 4)
    qp, kp, vp = pl.pallas_call(
        functools.partial(_qkv_proj_kernel, scale=scale, d_k=d_k),
        out_shape=(head_shape, head_shape, head_shape),
        grid=grid1,
        in_specs=[x_spec, x_spec, x_spec,
                  w_spec, b_spec, w_spec, b_spec, w_spec, b_spec],
        out_specs=(proj_out_spec, proj_out_spec, proj_out_spec),
        compiler_params=pltpu.CompilerParams(
            # seq axis kept "arbitrary" (sequential) so the resident weight
            # slab is not re-DMA'd; batch/head-group axes shard across TCs.
            dimension_semantics=("parallel", "parallel", "arbitrary"),
            vmem_limit_bytes=_vmem_limit(proj_est, budget)),
    )(qx, kx, vx, wq, bq, wk, bk, wv, bv)

    # ---- call 2: head-grouped flash attention -> concatenated context -------
    def _pick_attn_group():
        ok = [g for g in range(1, H + 1)
              if H % g == 0 and (g == H or (g * d_k) % 128 == 0)]
        for g in sorted(ok, reverse=True):
            if _attn_vmem_bytes(g, TQ, TK, d_k) <= budget // 2:
                return g
        return min(ok)

    HG = _pick_attn_group()
    grid2 = (B, H // HG, S // TQ, S // TK)
    q_spec = pl.BlockSpec((pl.Squeezed(), HG, TQ, d_k),
                          lambda b, hg, qi, ki: (b, hg, qi, 0))
    kv_spec = pl.BlockSpec((pl.Squeezed(), HG, TK, d_k),
                           lambda b, hg, qi, ki: (b, hg, ki, 0))
    ctx_spec = pl.BlockSpec((pl.Squeezed(), TQ, HG * d_k),
                            lambda b, hg, qi, ki: (b, qi, hg))

    ctx = pl.pallas_call(
        functools.partial(_attn_kernel, d_k=d_k),
        out_shape=jax.ShapeDtypeStruct((B, S, D), cdt),
        grid=grid2,
        in_specs=[q_spec, kv_spec, kv_spec],
        out_specs=ctx_spec,
        scratch_shapes=[
            pltpu.VMEM((HG, TQ, 1), jnp.float32),     # running row max
            pltpu.VMEM((HG, TQ, 1), jnp.float32),     # running denominator
            pltpu.VMEM((HG, TQ, d_k), jnp.float32),   # running numerator
        ],
        compiler_params=pltpu.CompilerParams(
            dimension_semantics=("parallel", "parallel", "parallel", "arbitrary"),
            vmem_limit_bytes=_vmem_limit(
                _attn_vmem_bytes(HG, TQ, TK, d_k), budget)),
    )(qp, kp, vp)

    # ---- call 3: lane-dense output projection  (B*S, D) @ (D, D) + b_o ------
    rows = B * S
    TM = _pick_tile(rows, 256)
    TN = _pick_tile(D, out_tile, lane=True)
    ctx2 = ctx.reshape(rows, D)
    outp_est = 2 * (TM * D * 2 + D * TN * 2 + TN * 4 + TM * TN * 4) + TM * TN * 4
    out = pl.pallas_call(
        _out_proj_kernel,
        out_shape=jax.ShapeDtypeStruct((rows, D), out_dtype),
        grid=(rows // TM, D // TN),
        in_specs=[pl.BlockSpec((TM, D), lambda i, j: (i, 0)),
                  pl.BlockSpec((D, TN), lambda i, j: (0, j)),
                  pl.BlockSpec((1, TN), lambda i, j: (0, j))],
        out_specs=pl.BlockSpec((TM, TN), lambda i, j: (i, j)),
        compiler_params=pltpu.CompilerParams(
            dimension_semantics=("parallel", "parallel"),
            vmem_limit_bytes=_vmem_limit(outp_est, budget)),
    )(ctx2, wo, bo)
    return out.reshape(B, S, D)


def _reference(q, k, v, params, *, n_heads):
    """Pure-JAX f32 reference matching the PyTorch module."""
    B, S, D = q.shape
    d_k = D // n_heads

    def proj(x, w, b):
        return x @ w + b

    def split(x):
        return x.reshape(B, S, n_heads, d_k).transpose(0, 2, 1, 3)   # (B,H,S,dk)

    qp = split(proj(q, params["wq"], params["bq"]))
    kp = split(proj(k, params["wk"], params["bk"]))
    vp = split(proj(v, params["wv"], params["bv"]))
    scores = jnp.einsum("bhqd,bhkd->bhqk", qp, kp) / math.sqrt(d_k)
    w = jax.nn.softmax(scores, axis=-1)
    av = jnp.einsum("bhqk,bhkd->bhqd", w, vp)
    cat = av.transpose(0, 2, 1, 3).reshape(B, S, D)
    return cat @ params["wo"] + params["bo"]


if __name__ == "__main__":
    B, S, D, H = 2, 8, 32, 4

    key = jax.random.PRNGKey(0)
    keys = jax.random.split(key, 12)

    scale = 1.0 / math.sqrt(D)
    params = {
        "wq": jax.random.uniform(keys[0], (D, D), jnp.float32, -scale, scale),
        "bq": jax.random.uniform(keys[1], (1, D), jnp.float32, -scale, scale),
        "wk": jax.random.uniform(keys[2], (D, D), jnp.float32, -scale, scale),
        "bk": jax.random.uniform(keys[3], (1, D), jnp.float32, -scale, scale),
        "wv": jax.random.uniform(keys[4], (D, D), jnp.float32, -scale, scale),
        "bv": jax.random.uniform(keys[5], (1, D), jnp.float32, -scale, scale),
        "wo": jax.random.uniform(keys[6], (D, D), jnp.float32, -scale, scale),
        "bo": jax.random.uniform(keys[7], (1, D), jnp.float32, -scale, scale),
    }

    q = jax.random.normal(keys[8], (B, S, D), jnp.float32)
    k = jax.random.normal(keys[9], (B, S, D), jnp.float32)
    v = jax.random.normal(keys[10], (B, S, D), jnp.float32)

    out = mha_forward(q, k, v, params, n_heads=H)
    out = jax.block_until_ready(out)

    ref = _reference(q, k, v, params, n_heads=H)
    assert out.shape == (B, S, D)
    assert out.dtype == q.dtype
    # Tolerance reflects bf16 MXU operands (f32 accumulation) vs the f32 reference.
    assert jnp.allclose(out, ref, atol=5e-2, rtol=5e-2), "mismatch vs reference"

    print("KERNEL_OK")
</pallas_src>

<mosaic_0001>
module attributes {stable_mosaic.version = 11 : i64} {
  func.func @_qkv_proj_kernel(%arg0: i32, %arg1: i32, %arg2: i32, %arg3: memref<1x8x32xbf16, #tpu.memory_space<vmem>>, %arg4: memref<1x8x32xbf16, #tpu.memory_space<vmem>>, %arg5: memref<1x8x32xbf16, #tpu.memory_space<vmem>>, %arg6: memref<32x32xbf16, #tpu.memory_space<vmem>>, %arg7: memref<1x32xf32, #tpu.memory_space<vmem>>, %arg8: memref<32x32xbf16, #tpu.memory_space<vmem>>, %arg9: memref<1x32xf32, #tpu.memory_space<vmem>>, %arg10: memref<32x32xbf16, #tpu.memory_space<vmem>>, %arg11: memref<1x32xf32, #tpu.memory_space<vmem>>, %arg12: memref<1x4x8x8xbf16, #tpu.memory_space<vmem>>, %arg13: memref<1x4x8x8xbf16, #tpu.memory_space<vmem>>, %arg14: memref<1x4x8x8xbf16, #tpu.memory_space<vmem>>) attributes {dimension_semantics = [#tpu.dimension_semantics<parallel>, #tpu.dimension_semantics<parallel>, #tpu.dimension_semantics<arbitrary>], iteration_bounds = array<i64: 2, 1, 1>, scalar_prefetch = 0 : i64, scratch_operands = 0 : i64, tpu.core_type = #tpu.core_type<tc>, window_params = [{transform_indices = @transform_0, window_bounds = array<i64: 1, 8, 32>}, {transform_indices = @transform_1, window_bounds = array<i64: 1, 8, 32>}, {transform_indices = @transform_2, window_bounds = array<i64: 1, 8, 32>}, {transform_indices = @transform_3, window_bounds = array<i64: 32, 32>}, {transform_indices = @transform_4, window_bounds = array<i64: 1, 32>}, {transform_indices = @transform_5, window_bounds = array<i64: 32, 32>}, {transform_indices = @transform_6, window_bounds = array<i64: 1, 32>}, {transform_indices = @transform_7, window_bounds = array<i64: 32, 32>}, {transform_indices = @transform_8, window_bounds = array<i64: 1, 32>}, {transform_indices = @transform_9, window_bounds = array<i64: 1, 4, 8, 8>}, {transform_indices = @transform_10, window_bounds = array<i64: 1, 4, 8, 8>}, {transform_indices = @transform_11, window_bounds = array<i64: 1, 4, 8, 8>}]} {
    %c0 = arith.constant 0 : index
    %c0_0 = arith.constant 0 : index
    %c0_1 = arith.constant 0 : index
    %0 = vector.load %arg3[%c0, %c0_0, %c0_1] : memref<1x8x32xbf16, #tpu.memory_space<vmem>>, vector<1x8x32xbf16>
    %1 = vector.shape_cast %0 : vector<1x8x32xbf16> to vector<8x32xbf16>
    %c0_2 = arith.constant 0 : index
    %c0_3 = arith.constant 0 : index
    %2 = vector.load %arg6[%c0_2, %c0_3] : memref<32x32xbf16, #tpu.memory_space<vmem>>, vector<32x32xbf16>
    %cst = arith.constant dense<0.000000e+00> : vector<8x32xf32>
    %3 = tpu.matmul %1, %2, %cst {dimension_numbers = #tpu.dot_dimension_numbers<[1], [0], [0], [1], [0, 0, 1, 1], [], []>} : vector<8x32xbf16>, vector<32x32xbf16>, vector<8x32xf32> -> vector<8x32xf32>
    %c0_4 = arith.constant 0 : index
    %c0_5 = arith.constant 0 : index
    %4 = vector.load %arg7[%c0_4, %c0_5] : memref<1x32xf32, #tpu.memory_space<vmem>>, vector<1x32xf32>
    %5 = vector.broadcast %4 : vector<1x32xf32> to vector<8x32xf32>
    %6 = arith.addf %3, %5 : vector<8x32xf32>
    %cst_6 = arith.constant 0.353553385 : f32
    %7 = vector.broadcast %cst_6 : f32 to vector<8x32xf32>
    %8 = arith.mulf %6, %7 : vector<8x32xf32>
    %9 = vector.extract_strided_slice %8 {offsets = [0, 0], sizes = [8, 8], strides = [1, 1]} : vector<8x32xf32> to vector<8x8xf32>
    %10 = arith.truncf %9 : vector<8x8xf32> to vector<8x8xbf16>
    %c0_7 = arith.constant 0 : index
    %c0_8 = arith.constant 0 : index
    %c0_9 = arith.constant 0 : index
    %c0_10 = arith.constant 0 : index
    %11 = vector.load %arg12[%c0_7, %c0_8, %c0_9, %c0_10] : memref<1x4x8x8xbf16, #tpu.memory_space<vmem>>, vector<1x1x8x8xbf16>
    %12 = vector.shape_cast %11 : vector<1x1x8x8xbf16> to vector<8x8xbf16>
    %13 = vector.shape_cast %10 : vector<8x8xbf16> to vector<1x1x8x8xbf16>
    tpu.vector_store %arg12[%c0_7, %c0_8, %c0_9, %c0_10], %13 {strides = array<i32>} : memref<1x4x8x8xbf16, #tpu.memory_space<vmem>>, vector<1x1x8x8xbf16>,
    %14 = vector.extract_strided_slice %8 {offsets = [0, 8], sizes = [8, 8], strides = [1, 1]} : vector<8x32xf32> to vector<8x8xf32>
    %15 = arith.truncf %14 : vector<8x8xf32> to vector<8x8xbf16>
    %c0_11 = arith.constant 0 : index
    %c1 = arith.constant 1 : index
    %c0_12 = arith.constant 0 : index
    %c0_13 = arith.constant 0 : index
    %16 = vector.load %arg12[%c0_11, %c1, %c0_12, %c0_13] : memref<1x4x8x8xbf16, #tpu.memory_space<vmem>>, vector<1x1x8x8xbf16>
    %17 = vector.shape_cast %16 : vector<1x1x8x8xbf16> to vector<8x8xbf16>
    %18 = vector.shape_cast %15 : vector<8x8xbf16> to vector<1x1x8x8xbf16>
    tpu.vector_store %arg12[%c0_11, %c1, %c0_12, %c0_13], %18 {strides = array<i32>} : memref<1x4x8x8xbf16, #tpu.memory_space<vmem>>, vector<1x1x8x8xbf16>,
    %19 = vector.extract_strided_slice %8 {offsets = [0, 16], sizes = [8, 8], strides = [1, 1]} : vector<8x32xf32> to vector<8x8xf32>
    %20 = arith.truncf %19 : vector<8x8xf32> to vector<8x8xbf16>
    %c0_14 = arith.constant 0 : index
    %c2 = arith.constant 2 : index
    %c0_15 = arith.constant 0 : index
    %c0_16 = arith.constant 0 : index
    %21 = vector.load %arg12[%c0_14, %c2, %c0_15, %c0_16] : memref<1x4x8x8xbf16, #tpu.memory_space<vmem>>, vector<1x1x8x8xbf16>
    %22 = vector.shape_cast %21 : vector<1x1x8x8xbf16> to vector<8x8xbf16>
    %23 = vector.shape_cast %20 : vector<8x8xbf16> to vector<1x1x8x8xbf16>
    tpu.vector_store %arg12[%c0_14, %c2, %c0_15, %c0_16], %23 {strides = array<i32>} : memref<1x4x8x8xbf16, #tpu.memory_space<vmem>>, vector<1x1x8x8xbf16>,
    %24 = vector.extract_strided_slice %8 {offsets = [0, 24], sizes = [8, 8], strides = [1, 1]} : vector<8x32xf32> to vector<8x8xf32>
    %25 = arith.truncf %24 : vector<8x8xf32> to vector<8x8xbf16>
    %c0_17 = arith.constant 0 : index
    %c3 = arith.constant 3 : index
    %c0_18 = arith.constant 0 : index
    %c0_19 = arith.constant 0 : index
    %26 = vector.load %arg12[%c0_17, %c3, %c0_18, %c0_19] : memref<1x4x8x8xbf16, #tpu.memory_space<vmem>>, vector<1x1x8x8xbf16>
    %27 = vector.shape_cast %26 : vector<1x1x8x8xbf16> to vector<8x8xbf16>
    %28 = vector.shape_cast %25 : vector<8x8xbf16> to vector<1x1x8x8xbf16>
    tpu.vector_store %arg12[%c0_17, %c3, %c0_18, %c0_19], %28 {strides = array<i32>} : memref<1x4x8x8xbf16, #tpu.memory_space<vmem>>, vector<1x1x8x8xbf16>,
    %c0_20 = arith.constant 0 : index
    %c0_21 = arith.constant 0 : index
    %c0_22 = arith.constant 0 : index
    %29 = vector.load %arg4[%c0_20, %c0_21, %c0_22] : memref<1x8x32xbf16, #tpu.memory_space<vmem>>, vector<1x8x32xbf16>
    %30 = vector.shape_cast %29 : vector<1x8x32xbf16> to vector<8x32xbf16>
    %c0_23 = arith.constant 0 : index
    %c0_24 = arith.constant 0 : index
    %31 = vector.load %arg8[%c0_23, %c0_24] : memref<32x32xbf16, #tpu.memory_space<vmem>>, vector<32x32xbf16>
    %cst_25 = arith.constant dense<0.000000e+00> : vector<8x32xf32>
    %32 = tpu.matmul %30, %31, %cst_25 {dimension_numbers = #tpu.dot_dimension_numbers<[1], [0], [0], [1], [0, 0, 1, 1], [], []>} : vector<8x32xbf16>, vector<32x32xbf16>, vector<8x32xf32> -> vector<8x32xf32>
    %c0_26 = arith.constant 0 : index
    %c0_27 = arith.constant 0 : index
    %33 = vector.load %arg9[%c0_26, %c0_27] : memref<1x32xf32, #tpu.memory_space<vmem>>, vector<1x32xf32>
    %34 = vector.broadcast %33 : vector<1x32xf32> to vector<8x32xf32>
    %35 = arith.addf %32, %34 : vector<8x32xf32>
    %36 = vector.extract_strided_slice %35 {offsets = [0, 0], sizes = [8, 8], strides = [1, 1]} : vector<8x32xf32> to vector<8x8xf32>
    %37 = arith.truncf %36 : vector<8x8xf32> to vector<8x8xbf16>
    %c0_28 = arith.constant 0 : index
    %c0_29 = arith.constant 0 : index
    %c0_30 = arith.constant 0 : index
    %c0_31 = arith.constant 0 : index
    %38 = vector.load %arg13[%c0_28, %c0_29, %c0_30, %c0_31] : memref<1x4x8x8xbf16, #tpu.memory_space<vmem>>, vector<1x1x8x8xbf16>
    %39 = vector.shape_cast %38 : vector<1x1x8x8xbf16> to vector<8x8xbf16>
    %40 = vector.shape_cast %37 : vector<8x8xbf16> to vector<1x1x8x8xbf16>
    tpu.vector_store %arg13[%c0_28, %c0_29, %c0_30, %c0_31], %40 {strides = array<i32>} : memref<1x4x8x8xbf16, #tpu.memory_space<vmem>>, vector<1x1x8x8xbf16>,
    %41 = vector.extract_strided_slice %35 {offsets = [0, 8], sizes = [8, 8], strides = [1, 1]} : vector<8x32xf32> to vector<8x8xf32>
    %42 = arith.truncf %41 : vector<8x8xf32> to vector<8x8xbf16>
    %c0_32 = arith.constant 0 : index
    %c1_33 = arith.constant 1 : index
    %c0_34 = arith.constant 0 : index
    %c0_35 = arith.constant 0 : index
    %43 = vector.load %arg13[%c0_32, %c1_33, %c0_34, %c0_35] : memref<1x4x8x8xbf16, #tpu.memory_space<vmem>>, vector<1x1x8x8xbf16>
    %44 = vector.shape_cast %43 : vector<1x1x8x8xbf16> to vector<8x8xbf16>
    %45 = vector.shape_cast %42 : vector<8x8xbf16> to vector<1x1x8x8xbf16>
    tpu.vector_store %arg13[%c0_32, %c1_33, %c0_34, %c0_35], %45 {strides = array<i32>} : memref<1x4x8x8xbf16, #tpu.memory_space<vmem>>, vector<1x1x8x8xbf16>,
    %46 = vector.extract_strided_slice %35 {offsets = [0, 16], sizes = [8, 8], strides = [1, 1]} : vector<8x32xf32> to vector<8x8xf32>
    %47 = arith.truncf %46 : vector<8x8xf32> to vector<8x8xbf16>
    %c0_36 = arith.constant 0 : index
    %c2_37 = arith.constant 2 : index
    %c0_38 = arith.constant 0 : index
    %c0_39 = arith.constant 0 : index
    %48 = vector.load %arg13[%c0_36, %c2_37, %c0_38, %c0_39] : memref<1x4x8x8xbf16, #tpu.memory_space<vmem>>, vector<1x1x8x8xbf16>
    %49 = vector.shape_cast %48 : vector<1x1x8x8xbf16> to vector<8x8xbf16>
    %50 = vector.shape_cast %47 : vector<8x8xbf16> to vector<1x1x8x8xbf16>
    tpu.vector_store %arg13[%c0_36, %c2_37, %c0_38, %c0_39], %50 {strides = array<i32>} : memref<1x4x8x8xbf16, #tpu.memory_space<vmem>>, vector<1x1x8x8xbf16>,
    %51 = vector.extract_strided_slice %35 {offsets = [0, 24], sizes = [8, 8], strides = [1, 1]} : vector<8x32xf32> to vector<8x8xf32>
    %52 = arith.truncf %51 : vector<8x8xf32> to vector<8x8xbf16>
    %c0_40 = arith.constant 0 : index
    %c3_41 = arith.constant 3 : index
    %c0_42 = arith.constant 0 : index
    %c0_43 = arith.constant 0 : index
    %53 = vector.load %arg13[%c0_40, %c3_41, %c0_42, %c0_43] : memref<1x4x8x8xbf16, #tpu.memory_space<vmem>>, vector<1x1x8x8xbf16>
    %54 = vector.shape_cast %53 : vector<1x1x8x8xbf16> to vector<8x8xbf16>
    %55 = vector.shape_cast %52 : vector<8x8xbf16> to vector<1x1x8x8xbf16>
    tpu.vector_store %arg13[%c0_40, %c3_41, %c0_42, %c0_43], %55 {strides = array<i32>} : memref<1x4x8x8xbf16, #tpu.memory_space<vmem>>, vector<1x1x8x8xbf16>,
    %c0_44 = arith.constant 0 : index
    %c0_45 = arith.constant 0 : index
    %c0_46 = arith.constant 0 : index
    %56 = vector.load %arg5[%c0_44, %c0_45, %c0_46] : memref<1x8x32xbf16, #tpu.memory_space<vmem>>, vector<1x8x32xbf16>
    %57 = vector.shape_cast %56 : vector<1x8x32xbf16> to vector<8x32xbf16>
    %c0_47 = arith.constant 0 : index
    %c0_48 = arith.constant 0 : index
    %58 = vector.load %arg10[%c0_47, %c0_48] : memref<32x32xbf16, #tpu.memory_space<vmem>>, vector<32x32xbf16>
    %cst_49 = arith.constant dense<0.000000e+00> : vector<8x32xf32>
    %59 = tpu.matmul %57, %58, %cst_49 {dimension_numbers = #tpu.dot_dimension_numbers<[1], [0], [0], [1], [0, 0, 1, 1], [], []>} : vector<8x32xbf16>, vector<32x32xbf16>, vector<8x32xf32> -> vector<8x32xf32>
    %c0_50 = arith.constant 0 : index
    %c0_51 = arith.constant 0 : index
    %60 = vector.load %arg11[%c0_50, %c0_51] : memref<1x32xf32, #tpu.memory_space<vmem>>, vector<1x32xf32>
    %61 = vector.broadcast %60 : vector<1x32xf32> to vector<8x32xf32>
    %62 = arith.addf %59, %61 : vector<8x32xf32>
    %63 = vector.extract_strided_slice %62 {offsets = [0, 0], sizes = [8, 8], strides = [1, 1]} : vector<8x32xf32> to vector<8x8xf32>
    %64 = arith.truncf %63 : vector<8x8xf32> to vector<8x8xbf16>
    %c0_52 = arith.constant 0 : index
    %c0_53 = arith.constant 0 : index
    %c0_54 = arith.constant 0 : index
    %c0_55 = arith.constant 0 : index
    %65 = vector.load %arg14[%c0_52, %c0_53, %c0_54, %c0_55] : memref<1x4x8x8xbf16, #tpu.memory_space<vmem>>, vector<1x1x8x8xbf16>
    %66 = vector.shape_cast %65 : vector<1x1x8x8xbf16> to vector<8x8xbf16>
    %67 = vector.shape_cast %64 : vector<8x8xbf16> to vector<1x1x8x8xbf16>
    tpu.vector_store %arg14[%c0_52, %c0_53, %c0_54, %c0_55], %67 {strides = array<i32>} : memref<1x4x8x8xbf16, #tpu.memory_space<vmem>>, vector<1x1x8x8xbf16>,
    %68 = vector.extract_strided_slice %62 {offsets = [0, 8], sizes = [8, 8], strides = [1, 1]} : vector<8x32xf32> to vector<8x8xf32>
    %69 = arith.truncf %68 : vector<8x8xf32> to vector<8x8xbf16>
    %c0_56 = arith.constant 0 : index
    %c1_57 = arith.constant 1 : index
    %c0_58 = arith.constant 0 : index
    %c0_59 = arith.constant 0 : index
    %70 = vector.load %arg14[%c0_56, %c1_57, %c0_58, %c0_59] : memref<1x4x8x8xbf16, #tpu.memory_space<vmem>>, vector<1x1x8x8xbf16>
    %71 = vector.shape_cast %70 : vector<1x1x8x8xbf16> to vector<8x8xbf16>
    %72 = vector.shape_cast %69 : vector<8x8xbf16> to vector<1x1x8x8xbf16>
    tpu.vector_store %arg14[%c0_56, %c1_57, %c0_58, %c0_59], %72 {strides = array<i32>} : memref<1x4x8x8xbf16, #tpu.memory_space<vmem>>, vector<1x1x8x8xbf16>,
    %73 = vector.extract_strided_slice %62 {offsets = [0, 16], sizes = [8, 8], strides = [1, 1]} : vector<8x32xf32> to vector<8x8xf32>
    %74 = arith.truncf %73 : vector<8x8xf32> to vector<8x8xbf16>
    %c0_60 = arith.constant 0 : index
    %c2_61 = arith.constant 2 : index
    %c0_62 = arith.constant 0 : index
    %c0_63 = arith.constant 0 : index
    %75 = vector.load %arg14[%c0_60, %c2_61, %c0_62, %c0_63] : memref<1x4x8x8xbf16, #tpu.memory_space<vmem>>, vector<1x1x8x8xbf16>
    %76 = vector.shape_cast %75 : vector<1x1x8x8xbf16> to vector<8x8xbf16>
    %77 = vector.shape_cast %74 : vector<8x8xbf16> to vector<1x1x8x8xbf16>
    tpu.vector_store %arg14[%c0_60, %c2_61, %c0_62, %c0_63], %77 {strides = array<i32>} : memref<1x4x8x8xbf16, #tpu.memory_space<vmem>>, vector<1x1x8x8xbf16>,
    %78 = vector.extract_strided_slice %62 {offsets = [0, 24], sizes = [8, 8], strides = [1, 1]} : vector<8x32xf32> to vector<8x8xf32>
    %79 = arith.truncf %78 : vector<8x8xf32> to vector<8x8xbf16>
    %c0_64 = arith.constant 0 : index
    %c3_65 = arith.constant 3 : index
    %c0_66 = arith.constant 0 : index
    %c0_67 = arith.constant 0 : index
    %80 = vector.load %arg14[%c0_64, %c3_65, %c0_66, %c0_67] : memref<1x4x8x8xbf16, #tpu.memory_space<vmem>>, vector<1x1x8x8xbf16>
    %81 = vector.shape_cast %80 : vector<1x1x8x8xbf16> to vector<8x8xbf16>
    %82 = vector.shape_cast %79 : vector<8x8xbf16> to vector<1x1x8x8xbf16>
    tpu.vector_store %arg14[%c0_64, %c3_65, %c0_66, %c0_67], %82 {strides = array<i32>} : memref<1x4x8x8xbf16, #tpu.memory_space<vmem>>, vector<1x1x8x8xbf16>,
    return
  }
  func.func @transform_0(%arg0: i32, %arg1: i32, %arg2: i32) -> (i32, i32, i32) {
    %c0_i32 = arith.constant 0 : i32
    %c0_i32_0 = arith.constant 0 : i32
    return %arg0, %arg2, %c0_i32 : i32, i32, i32
  }
  func.func @transform_1(%arg0: i32, %arg1: i32, %arg2: i32) -> (i32, i32, i32) {
    %c0_i32 = arith.constant 0 : i32
    %c0_i32_0 = arith.constant 0 : i32
    return %arg0, %arg2, %c0_i32 : i32, i32, i32
  }
  func.func @transform_2(%arg0: i32, %arg1: i32, %arg2: i32) -> (i32, i32, i32) {
    %c0_i32 = arith.constant 0 : i32
    %c0_i32_0 = arith.constant 0 : i32
    return %arg0, %arg2, %c0_i32 : i32, i32, i32
  }
  func.func @transform_3(%arg0: i32, %arg1: i32, %arg2: i32) -> (i32, i32) {
    %c0_i32 = arith.constant 0 : i32
    %c0_i32_0 = arith.constant 0 : i32
    return %c0_i32, %arg1 : i32, i32
  }
  func.func @transform_4(%arg0: i32, %arg1: i32, %arg2: i32) -> (i32, i32) {
    %c0_i32 = arith.constant 0 : i32
    %c0_i32_0 = arith.constant 0 : i32
    return %c0_i32, %arg1 : i32, i32
  }
  func.func @transform_5(%arg0: i32, %arg1: i32, %arg2: i32) -> (i32, i32) {
    %c0_i32 = arith.constant 0 : i32
    %c0_i32_0 = arith.constant 0 : i32
    return %c0_i32, %arg1 : i32, i32
  }
  func.func @transform_6(%arg0: i32, %arg1: i32, %arg2: i32) -> (i32, i32) {
    %c0_i32 = arith.constant 0 : i32
    %c0_i32_0 = arith.constant 0 : i32
    return %c0_i32, %arg1 : i32, i32
  }
  func.func @transform_7(%arg0: i32, %arg1: i32, %arg2: i32) -> (i32, i32) {
    %c0_i32 = arith.constant 0 : i32
    %c0_i32_0 = arith.constant 0 : i32
    return %c0_i32, %arg1 : i32, i32
  }
  func.func @transform_8(%arg0: i32, %arg1: i32, %arg2: i32) -> (i32, i32) {
    %c0_i32 = arith.constant 0 : i32
    %c0_i32_0 = arith.constant 0 : i32
    return %c0_i32, %arg1 : i32, i32
  }
  func.func @transform_9(%arg0: i32, %arg1: i32, %arg2: i32) -> (i32, i32, i32, i32) {
    %c0_i32 = arith.constant 0 : i32
    %c0_i32_0 = arith.constant 0 : i32
    return %arg0, %arg1, %arg2, %c0_i32 : i32, i32, i32, i32
  }
  func.func @transform_10(%arg0: i32, %arg1: i32, %arg2: i32) -> (i32, i32, i32, i32) {
    %c0_i32 = arith.constant 0 : i32
    %c0_i32_0 = arith.constant 0 : i32
    return %arg0, %arg1, %arg2, %c0_i32 : i32, i32, i32, i32
  }
  func.func @transform_11(%arg0: i32, %arg1: i32, %arg2: i32) -> (i32, i32, i32, i32) {
    %c0_i32 = arith.constant 0 : i32
    %c0_i32_0 = arith.constant 0 : i32
    return %arg0, %arg1, %arg2, %c0_i32 : i32, i32, i32, i32
  }
}

</mosaic_0001>

<llo_original>
// kernel: tpu_custom_call.1
$region0: #{tpu_custom_call.1}
  #allocation0 [shape = 'u32[]', space=smem, size = 0x4, offset = 0x4, fixed_abs, tag = 'smem constant byte address 0x4 - core index']
  #allocation1 [shape = 'u32[144,128]{1,0:T(1,128)}', space=vmem, size = 0x12000, scoped, tag = 'internal scratch']
  %s0 = inlined_call_operand.hbm [shape: bf16[2,8,32], index: 0, kind: input, shape index: {}]
  %s1 = inlined_call_operand.hbm [shape: bf16[2,8,32], index: 1, kind: input, shape index: {}]
  %s2 = inlined_call_operand.hbm [shape: bf16[2,8,32], index: 2, kind: input, shape index: {}]
  %s3 = inlined_call_operand.hbm [shape: bf16[32,32], index: 3, kind: input, shape index: {}]
  %s4 = inlined_call_operand.vmem [shape: f32[1,32], index: 4, kind: input, shape index: {}]
  %s5 = inlined_call_operand.vmem [shape: bf16[32,32], index: 5, kind: input, shape index: {}]
  %s6 = inlined_call_operand.vmem [shape: f32[1,32], index: 6, kind: input, shape index: {}]
  %s7 = inlined_call_operand.hbm [shape: bf16[32,32], index: 7, kind: input, shape index: {}]
  %s8 = inlined_call_operand.vmem [shape: f32[1,32], index: 8, kind: input, shape index: {}]
  %s9 = inlined_call_operand.hbm [shape: bf16[2,4,8,8], index: 9, kind: output, shape index: {0}]
  %s10 = inlined_call_operand.hbm [shape: bf16[2,4,8,8], index: 10, kind: output, shape index: {1}]
  %s11 = inlined_call_operand.hbm [shape: bf16[2,4,8,8], index: 11, kind: output, shape index: {2}]
  %12 = xla_tuple %s9, %s10, %s11
  %s13 = sld [smem:[#allocation0]]
  $region105: #{tpu_custom_call.1} parent=0
    _
  %s15 = ssub.s32 1, %s13
  %s16 = scalar_select 0, %s15, %s13
  $region1: #{tpu_custom_call.1} parent=0
    #allocation2 [shape = 'u8[4096]{0}', space=vmem, size = 0x1000, scoped, tag = 'input window, operand 0']
    #allocation3 [shape = 's32[2]{0}', space=sflag, size = 0x8, scoped, tag = 'scoped memory for tpu_custom_call.1']
    #allocation4 [shape = 's32[2]{0}', space=sflag, size = 0x8, scoped, tag = 'scoped memory for tpu_custom_call.1']
    #allocation5 [shape = 'u8[4096]{0}', space=vmem, size = 0x1000, scoped, tag = 'input window, operand 1']
    #allocation6 [shape = 's32[2]{0}', space=sflag, size = 0x8, scoped, tag = 'scoped memory for tpu_custom_call.1']
    #allocation7 [shape = 'u8[4096]{0}', space=vmem, size = 0x1000, scoped, tag = 'input window, operand 2']
    #allocation8 [shape = 'u8[8192]{0}', space=vmem, size = 0x2000, scoped, tag = 'input window, operand 3, single buffered']
    #allocation9 [shape = 's32[1]{0}', space=sflag, size = 0x4, scoped, tag = 'scoped memory for tpu_custom_call.1']
    #allocation10 [shape = 'u8[8192]{0}', space=vmem, size = 0x2000, scoped, tag = 'input window, operand 7, single buffered']
    #allocation11 [shape = 'u8[16384]{0}', space=vmem, size = 0x4000, scoped, tag = 'output window, operand 0']
    #allocation12 [shape = 'u8[16384]{0}', space=vmem, size = 0x4000, scoped, tag = 'output window, operand 1']
    #allocation13 [shape = 's32[2]{0}', space=sflag, size = 0x8, scoped, tag = 'scoped memory for tpu_custom_call.1']
    #allocation14 [shape = 'u8[16384]{0}', space=vmem, size = 0x4000, scoped, tag = 'output window, operand 2']
    %17 = vsyncpa [#allocation3], 0
    %s18 = scalar_lea.sflag [#allocation3], 1
    %19 = vsyncpa %s18, 0
    %20 = vsyncpa [#allocation6], 0
    %s21 = scalar_lea.sflag [#allocation6], 1
    %22 = vsyncpa %s21, 0
    %23 = vsyncpa [#allocation9], 0
    %24 = vsyncpa [#allocation4], 0
    %s25 = scalar_lea.sflag [#allocation4], 1
    %26 = vsyncpa %s25, 0
    %27 = vsyncpa [#allocation13], 0
    %s28 = scalar_lea.sflag [#allocation13], 1
    %29 = vsyncpa %s28, 0
    loop: start=0, step=1, limit=4
    $region2: #{tpu_custom_call.1} parent=1 // loop_pre_header
      _
    $region3: #{tpu_custom_call.1} parent=1 // loop_header
      %s31 = sphi 0, %s35
      %p32 = scmp.ge.s32.totalorder %s31, 4
      %s38 = sphi 0, %s57
      %s39 = sphi 0, %s53
      %s40 = sphi 0, %s49
      %s41 = sphi 0, %s38
      %s42 = sphi 0, %s39
      %s43 = sphi 0, %s40
      %s44 = sphi 0, %s41
      %s45 = sphi 0, %s42
      %s46 = sphi 0, %s43
      %s62 = sphi 0, %s64
      %s65 = sphi 0, %s62
      %s66 = sphi 0, %s65
      %s82 = sphi 0, %s66
      %s90 = sphi 0, %s92
      %s93 = sphi 0, %s90
      %s94 = sphi 0, %s93
      %s110 = sphi 0, %s94
      %s118 = sphi 0, %s120
      %s121 = sphi 0, %s118
      %s122 = sphi 0, %s121
      %s138 = sphi 0, %s122
      %s144 = sphi 0, %s146
      %s147 = sphi 0, %s144
      %s148 = sphi 0, %s147
      %s164 = sphi 0, %s148
      %s170 = sphi 0, %s172
      %s173 = sphi 0, %s170
      %s174 = sphi 0, %s173
      %s190 = sphi 0, %s174
      %s196 = sphi 0, %s198
      %s199 = sphi 0, %s196
      %s200 = sphi 0, %s199
      %s216 = sphi 0, %s200
      %s222 = sphi 0, %s224
      %s225 = sphi 0, %s222
      %s226 = sphi 0, %s225
      %s242 = sphi 0, %s226
      %s248 = sphi 0, %s250
      %s251 = sphi 0, %s248
      %s252 = sphi 0, %s251
      %s268 = sphi 0, %s252
      %s274 = sphi 0, %s276
      %s277 = sphi 0, %s274
      %s278 = sphi 0, %s277
      %s294 = sphi 0, %s278
      %s304 = sphi 0, %s306
      %s307 = sphi 0, %s304
      %s308 = sphi 0, %s307
      %s324 = sphi 0, %s308
      %s334 = sphi 0, %s336
      %s337 = sphi 0, %s334
      %s338 = sphi 0, %s337
      %s354 = sphi 0, %s338
      %s364 = sphi 0, %s366
      %s367 = sphi 0, %s364
      %s368 = sphi 0, %s367
      %s384 = sphi 0, %s368
    $region4: #{tpu_custom_call.1} parent=1 // loop_header_branch
      %34 = sbr.rel (%p32) target = $region8
    $region5: #{tpu_custom_call.1} parent=1 // loop_body
      %s36 = ssub.s32 %s31, 1
      %s37 = ssub.s32 %s31, 2
      %s47 = sadd.s32 1, %s40
      %p48 = scmp.ge.s32.totalorder %s47, 1
      %s49 = scalar_select %p48, 0, %s47
      %s50 = sadd.s32 1, %s39
      %s51 = scalar_select %p48, %s50, %s39
      %p52 = scmp.ge.s32.totalorder %s51, 1
      %s53 = scalar_select %p52, 0, %s51
      %s54 = sadd.s32 1, %s38
      %s55 = scalar_select %p52, %s54, %s38
      %p56 = scmp.ge.s32.totalorder %s55, 2
      %s57 = scalar_select %p56, 0, %s55
      %s58 = ssub.s32 %s38, %s57
      %s59 = ssub.s32 %s40, %s49
      %s60 = sor.u32 %s58, %s59
      %p61 = scmp.eq.s32.totalorder %s60, 0
      %s63 = sadd.s32 %s62, 1
      %s64 = scalar_select %p61, %s62, %s63
      %p67 = pneg %p61
      %p68 = scmp.eq.s32.totalorder %s31, 1
      %p69 = por %p67, %p68
      %p70 = scmp.ne.s32.totalorder %s62, %s65
      %p71 = scmp.eq.s32.totalorder %s31, 0
      %p72 = por %p70, %p71
      %p73 = scmp.ne.s32.totalorder %s62, %s65
      %p74 = scmp.eq.s32.totalorder %s36, 1
      %p75 = por %p73, %p74
      %p76 = scmp.ne.s32.totalorder %s65, %s66
      %p77 = scmp.eq.s32.totalorder %s36, 0
      %p78 = por %p76, %p77
      %p79 = scmp.ne.s32.totalorder %s65, %s66
      %p80 = scmp.eq.s32.totalorder %s37, 1
      %p81 = por %p79, %p80
      %p83 = scmp.ne.s32.totalorder %s66, %s82
      %p84 = scmp.eq.s32.totalorder %s37, 0
      %p85 = por %p83, %p84
      %s86 = ssub.s32 %s38, %s57
      %s87 = ssub.s32 %s40, %s49
      %s88 = sor.u32 %s86, %s87
      %p89 = scmp.eq.s32.totalorder %s88, 0
      %s91 = sadd.s32 %s90, 1
      %s92 = scalar_select %p89, %s90, %s91
      %p95 = pneg %p89
      %p96 = scmp.eq.s32.totalorder %s31, 1
      %p97 = por %p95, %p96
      %p98 = scmp.ne.s32.totalorder %s90, %s93
      %p99 = scmp.eq.s32.totalorder %s31, 0
      %p100 = por %p98, %p99
      %p101 = scmp.ne.s32.totalorder %s90, %s93
      %p102 = scmp.eq.s32.totalorder %s36, 1
      %p103 = por %p101, %p102
      %p104 = scmp.ne.s32.totalorder %s93, %s94
      %p105 = scmp.eq.s32.totalorder %s36, 0
      %p106 = por %p104, %p105
      %p107 = scmp.ne.s32.totalorder %s93, %s94
      %p108 = scmp.eq.s32.totalorder %s37, 1
      %p109 = por %p107, %p108
      %p111 = scmp.ne.s32.totalorder %s94, %s110
      %p112 = scmp.eq.s32.totalorder %s37, 0
      %p113 = por %p111, %p112
      %s114 = ssub.s32 %s38, %s57
      %s115 = ssub.s32 %s40, %s49
      %s116 = sor.u32 %s114, %s115
      %p117 = scmp.eq.s32.totalorder %s116, 0
      %s119 = sadd.s32 %s118, 1
      %s120 = scalar_select %p117, %s118, %s119
      %p123 = pneg %p117
      %p124 = scmp.eq.s32.totalorder %s31, 1
      %p125 = por %p123, %p124
      %p126 = scmp.ne.s32.totalorder %s118, %s121
      %p127 = scmp.eq.s32.totalorder %s31, 0
      %p128 = por %p126, %p127
      %p129 = scmp.ne.s32.totalorder %s118, %s121
      %p130 = scmp.eq.s32.totalorder %s36, 1
      %p131 = por %p129, %p130
      %p132 = scmp.ne.s32.totalorder %s121, %s122
      %p133 = scmp.eq.s32.totalorder %s36, 0
      %p134 = por %p132, %p133
      %p135 = scmp.ne.s32.totalorder %s121, %s122
      %p136 = scmp.eq.s32.totalorder %s37, 1
      %p137 = por %p135, %p136
      %p139 = scmp.ne.s32.totalorder %s122, %s138
      %p140 = scmp.eq.s32.totalorder %s37, 0
      %p141 = por %p139, %p140
      %s142 = ssub.s32 %s39, %s53
      %p143 = scmp.eq.s32.totalorder %s142, 0
      %s145 = sadd.s32 %s144, 1
      %s146 = scalar_select %p143, %s144, %s145
      %p149 = pneg %p143
      %p150 = scmp.eq.s32.totalorder %s31, 1
      %p151 = por %p149, %p150
      %p152 = scmp.ne.s32.totalorder %s144, %s147
      %p153 = scmp.eq.s32.totalorder %s31, 0
      %p154 = por %p152, %p153
      %p155 = scmp.ne.s32.totalorder %s144, %s147
      %p156 = scmp.eq.s32.totalorder %s36, 1
      %p157 = por %p155, %p156
      %p158 = scmp.ne.s32.totalorder %s147, %s148
      %p159 = scmp.eq.s32.totalorder %s36, 0
      %p160 = por %p158, %p159
      %p161 = scmp.ne.s32.totalorder %s147, %s148
      %p162 = scmp.eq.s32.totalorder %s37, 1
      %p163 = por %p161, %p162
      %p165 = scmp.ne.s32.totalorder %s148, %s164
      %p166 = scmp.eq.s32.totalorder %s37, 0
      %p167 = por %p165, %p166
      %s168 = ssub.s32 %s39, %s53
      %p169 = scmp.eq.s32.totalorder %s168, 0
      %s171 = sadd.s32 %s170, 1
      %s172 = scalar_select %p169, %s170, %s171
      %p175 = pneg %p169
      %p176 = scmp.eq.s32.totalorder %s31, 1
      %p177 = por %p175, %p176
      %p178 = scmp.ne.s32.totalorder %s170, %s173
      %p179 = scmp.eq.s32.totalorder %s31, 0
      %p180 = por %p178, %p179
      %p181 = scmp.ne.s32.totalorder %s170, %s173
      %p182 = scmp.eq.s32.totalorder %s36, 1
      %p183 = por %p181, %p182
      %p184 = scmp.ne.s32.totalorder %s173, %s174
      %p185 = scmp.eq.s32.totalorder %s36, 0
      %p186 = por %p184, %p185
      %p187 = scmp.ne.s32.totalorder %s173, %s174
      %p188 = scmp.eq.s32.totalorder %s37, 1
      %p189 = por %p187, %p188
      %p191 = scmp.ne.s32.totalorder %s174, %s190
      %p192 = scmp.eq.s32.totalorder %s37, 0
      %p193 = por %p191, %p192
      %s194 = ssub.s32 %s39, %s53
      %p195 = scmp.eq.s32.totalorder %s194, 0
      %s197 = sadd.s32 %s196, 1
      %s198 = scalar_select %p195, %s196, %s197
      %p201 = pneg %p195
      %p202 = scmp.eq.s32.totalorder %s31, 1
      %p203 = por %p201, %p202
      %p204 = scmp.ne.s32.totalorder %s196, %s199
      %p205 = scmp.eq.s32.totalorder %s31, 0
      %p206 = por %p204, %p205
      %p207 = scmp.ne.s32.totalorder %s196, %s199
      %p208 = scmp.eq.s32.totalorder %s36, 1
      %p209 = por %p207, %p208
      %p210 = scmp.ne.s32.totalorder %s199, %s200
      %p211 = scmp.eq.s32.totalorder %s36, 0
      %p212 = por %p210, %p211
      %p213 = scmp.ne.s32.totalorder %s199, %s200
      %p214 = scmp.eq.s32.totalorder %s37, 1
      %p215 = por %p213, %p214
      %p217 = scmp.ne.s32.totalorder %s200, %s216
      %p218 = scmp.eq.s32.totalorder %s37, 0
      %p219 = por %p217, %p218
      %s220 = ssub.s32 %s39, %s53
      %p221 = scmp.eq.s32.totalorder %s220, 0
      %s223 = sadd.s32 %s222, 1
      %s224 = scalar_select %p221, %s222, %s223
      %p227 = pneg %p221
      %p228 = scmp.eq.s32.totalorder %s31, 1
      %p229 = por %p227, %p228
      %p230 = scmp.ne.s32.totalorder %s222, %s225
      %p231 = scmp.eq.s32.totalorder %s31, 0
      %p232 = por %p230, %p231
      %p233 = scmp.ne.s32.totalorder %s222, %s225
      %p234 = scmp.eq.s32.totalorder %s36, 1
      %p235 = por %p233, %p234
      %p236 = scmp.ne.s32.totalorder %s225, %s226
      %p237 = scmp.eq.s32.totalorder %s36, 0
      %p238 = por %p236, %p237
      %p239 = scmp.ne.s32.totalorder %s225, %s226
      %p240 = scmp.eq.s32.totalorder %s37, 1
      %p241 = por %p239, %p240
      %p243 = scmp.ne.s32.totalorder %s226, %s242
      %p244 = scmp.eq.s32.totalorder %s37, 0
      %p245 = por %p243, %p244
      %s246 = ssub.s32 %s39, %s53
      %p247 = scmp.eq.s32.totalorder %s246, 0
      %s249 = sadd.s32 %s248, 1
      %s250 = scalar_select %p247, %s248, %s249
      %p253 = pneg %p247
      %p254 = scmp.eq.s32.totalorder %s31, 1
      %p255 = por %p253, %p254
      %p256 = scmp.ne.s32.totalorder %s248, %s251
      %p257 = scmp.eq.s32.totalorder %s31, 0
      %p258 = por %p256, %p257
      %p259 = scmp.ne.s32.totalorder %s248, %s251
      %p260 = scmp.eq.s32.totalorder %s36, 1
      %p261 = por %p259, %p260
      %p262 = scmp.ne.s32.totalorder %s251, %s252
      %p263 = scmp.eq.s32.totalorder %s36, 0
      %p264 = por %p262, %p263
      %p265 = scmp.ne.s32.totalorder %s251, %s252
      %p266 = scmp.eq.s32.totalorder %s37, 1
      %p267 = por %p265, %p266
      %p269 = scmp.ne.s32.totalorder %s252, %s268
      %p270 = scmp.eq.s32.totalorder %s37, 0
      %p271 = por %p269, %p270
      %s272 = ssub.s32 %s39, %s53
      %p273 = scmp.eq.s32.totalorder %s272, 0
      %s275 = sadd.s32 %s274, 1
      %s276 = scalar_select %p273, %s274, %s275
      %p279 = pneg %p273
      %p280 = scmp.eq.s32.totalorder %s31, 1
      %p281 = por %p279, %p280
      %p282 = scmp.ne.s32.totalorder %s274, %s277
      %p283 = scmp.eq.s32.totalorder %s31, 0
      %p284 = por %p282, %p283
      %p285 = scmp.ne.s32.totalorder %s274, %s277
      %p286 = scmp.eq.s32.totalorder %s36, 1
      %p287 = por %p285, %p286
      %p288 = scmp.ne.s32.totalorder %s277, %s278
      %p289 = scmp.eq.s32.totalorder %s36, 0
      %p290 = por %p288, %p289
      %p291 = scmp.ne.s32.totalorder %s277, %s278
      %p292 = scmp.eq.s32.totalorder %s37, 1
      %p293 = por %p291, %p292
      %p295 = scmp.ne.s32.totalorder %s278, %s294
      %p296 = scmp.eq.s32.totalorder %s37, 0
      %p297 = por %p295, %p296
      %s298 = ssub.s32 %s38, %s57
      %s299 = ssub.s32 %s39, %s53
      %s300 = sor.u32 %s298, %s299
      %s301 = ssub.s32 %s40, %s49
      %s302 = sor.u32 %s300, %s301
      %p303 = scmp.eq.s32.totalorder %s302, 0
      %s305 = sadd.s32 %s304, 1
      %s306 = scalar_select %p303, %s304, %s305
      %p309 = pneg %p303
      %p310 = scmp.eq.s32.totalorder %s31, 1
      %p311 = por %p309, %p310
      %p312 = scmp.ne.s32.totalorder %s304, %s307
      %p313 = scmp.eq.s32.totalorder %s31, 0
      %p314 = por %p312, %p313
      %p315 = scmp.ne.s32.totalorder %s304, %s307
      %p316 = scmp.eq.s32.totalorder %s36, 1
      %p317 = por %p315, %p316
      %p318 = scmp.ne.s32.totalorder %s307, %s308
      %p319 = scmp.eq.s32.totalorder %s36, 0
      %p320 = por %p318, %p319
      %p321 = scmp.ne.s32.totalorder %s307, %s308
      %p322 = scmp.eq.s32.totalorder %s37, 1
      %p323 = por %p321, %p322
      %p325 = scmp.ne.s32.totalorder %s308, %s324
      %p326 = scmp.eq.s32.totalorder %s37, 0
      %p327 = por %p325, %p326
      %s328 = ssub.s32 %s38, %s57
      %s329 = ssub.s32 %s39, %s53
      %s330 = sor.u32 %s328, %s329
      %s331 = ssub.s32 %s40, %s49
      %s332 = sor.u32 %s330, %s331
      %p333 = scmp.eq.s32.totalorder %s332, 0
      %s335 = sadd.s32 %s334, 1
      %s336 = scalar_select %p333, %s334, %s335
      %p339 = pneg %p333
      %p340 = scmp.eq.s32.totalorder %s31, 1
      %p341 = por %p339, %p340
      %p342 = scmp.ne.s32.totalorder %s334, %s337
      %p343 = scmp.eq.s32.totalorder %s31, 0
      %p344 = por %p342, %p343
      %p345 = scmp.ne.s32.totalorder %s334, %s337
      %p346 = scmp.eq.s32.totalorder %s36, 1
      %p347 = por %p345, %p346
      %p348 = scmp.ne.s32.totalorder %s337, %s338
      %p349 = scmp.eq.s32.totalorder %s36, 0
      %p350 = por %p348, %p349
      %p351 = scmp.ne.s32.totalorder %s337, %s338
      %p352 = scmp.eq.s32.totalorder %s37, 1
      %p353 = por %p351, %p352
      %p355 = scmp.ne.s32.totalorder %s338, %s354
      %p356 = scmp.eq.s32.totalorder %s37, 0
      %p357 = por %p355, %p356
      %s358 = ssub.s32 %s38, %s57
      %s359 = ssub.s32 %s39, %s53
      %s360 = sor.u32 %s358, %s359
      %s361 = ssub.s32 %s40, %s49
      %s362 = sor.u32 %s360, %s361
      %p363 = scmp.eq.s32.totalorder %s362, 0
      %s365 = sadd.s32 %s364, 1
      %s366 = scalar_select %p363, %s364, %s365
      %p369 = pneg %p363
      %p370 = scmp.eq.s32.totalorder %s31, 1
      %p371 = por %p369, %p370
      %p372 = scmp.ne.s32.totalorder %s364, %s367
      %p373 = scmp.eq.s32.totalorder %s31, 0
      %p374 = por %p372, %p373
      %p375 = scmp.ne.s32.totalorder %s364, %s367
      %p376 = scmp.eq.s32.totalorder %s36, 1
      %p377 = por %p375, %p376
      %p378 = scmp.ne.s32.totalorder %s367, %s368
      %p379 = scmp.eq.s32.totalorder %s36, 0
      %p380 = por %p378, %p379
      %p381 = scmp.ne.s32.totalorder %s367, %s368
      %p382 = scmp.eq.s32.totalorder %s37, 1
      %p383 = por %p381, %p382
      %p385 = scmp.ne.s32.totalorder %s368, %s384
      %p386 = scmp.eq.s32.totalorder %s37, 0
      %p387 = por %p385, %p386
      %p388 = scmp.le.s32.totalorder 1, %s31
      %p389 = scmp.lt.s32.totalorder %s31, 3
      %p390 = pnand %p388, %p389
      %p391 = pneg %p390
      // Predicated region
      $region9: #{tpu_custom_call.1} parent=5 // pred_check
        _
      $region10: #{tpu_custom_call.1} parent=5 // pred_check_branch
        %393 = sbr.rel (%p390) target = $region12
      $region11: #{tpu_custom_call.1} parent=5 // pred_region
        %s394 = ssub.s32 %s31, 1
        // Predicated region
        $region13: #{tpu_custom_call.1} parent=11 // pred_check
          %p395 = pneg %p160
        $region14: #{tpu_custom_call.1} parent=11 // pred_check_branch
          %397 = sbr.rel (%p395) target = $region16
        $region15: #{tpu_custom_call.1} parent=11 // pred_region
          %s399 = ssub.s32 256, 256
          %400 = vsyncadd [#allocation9], %s399
          %s401 = smul.addr %s42, 64
          %s402 = scalar_lea.hbm %s3, %s401
          %s403 = sshll.u32 [#allocation8], 4
          %s404 = int_to_ptr.vmem [resolvable:$true] %s403
          %409 = dma.hbm_to_vmem [thread:$0]  %s402, 256, %s404, [#allocation9], 64, 64, 4
        $region16: #{tpu_custom_call.1} parent=11 // pred_fallthru
          _
        // Predicated region
        $region17: #{tpu_custom_call.1} parent=11 // pred_check
          %p410 = pneg %p186
        $region18: #{tpu_custom_call.1} parent=11 // pred_check_branch
          %412 = sbr.rel (%p410) target = $region20
        $region19: #{tpu_custom_call.1} parent=11 // pred_region
          %p413 = scmp.lt.s32.totalorder %s42, 0
          %s414 = scalar_select %p413, %s42, 0
          %s415 = scalar_lea.vmem %s4, %s414
        $region20: #{tpu_custom_call.1} parent=11 // pred_fallthru
          _
        // Predicated region
        $region21: #{tpu_custom_call.1} parent=11 // pred_check
          %p416 = pneg %p212
        $region22: #{tpu_custom_call.1} parent=11 // pred_check_branch
          %418 = sbr.rel (%p416) target = $region24
        $region23: #{tpu_custom_call.1} parent=11 // pred_region
          %p419 = scmp.lt.s32.totalorder %s42, 0
          %s420 = scalar_select %p419, %s42, 0
          %s421 = smul.addr %s420, 4
          %s422 = scalar_lea.vmem %s5, %s421
        $region24: #{tpu_custom_call.1} parent=11 // pred_fallthru
          _
        // Predicated region
        $region25: #{tpu_custom_call.1} parent=11 // pred_check
          %p423 = pneg %p238
        $region26: #{tpu_custom_call.1} parent=11 // pred_check_branch
          %425 = sbr.rel (%p423) target = $region28
        $region27: #{tpu_custom_call.1} parent=11 // pred_region
          %p426 = scmp.lt.s32.totalorder %s42, 0
          %s427 = scalar_select %p426, %s42, 0
          %s428 = scalar_lea.vmem %s6, %s427
        $region28: #{tpu_custom_call.1} parent=11 // pred_fallthru
          _
        // Predicated region
        $region29: #{tpu_custom_call.1} parent=11 // pred_check
          %p429 = pneg %p264
        $region30: #{tpu_custom_call.1} parent=11 // pred_check_branch
          %431 = sbr.rel (%p429) target = $region32
        $region31: #{tpu_custom_call.1} parent=11 // pred_region
          %s433 = ssub.s32 256, 256
          %434 = vsyncadd [#allocation9], %s433
          %s435 = smul.addr %s42, 64
          %s436 = scalar_lea.hbm %s7, %s435
          %s437 = sshll.u32 [#allocation10], 4
          %s438 = int_to_ptr.vmem [resolvable:$true] %s437
          %443 = dma.hbm_to_vmem [thread:$0]  %s436, 256, %s438, [#allocation9], 64, 64, 4
        $region32: #{tpu_custom_call.1} parent=11 // pred_fallthru
          _
        // Predicated region
        $region33: #{tpu_custom_call.1} parent=11 // pred_check
          %p444 = pneg %p290
        $region34: #{tpu_custom_call.1} parent=11 // pred_check_branch
          %446 = sbr.rel (%p444) target = $region36
        $region35: #{tpu_custom_call.1} parent=11 // pred_region
          %p447 = scmp.lt.s32.totalorder %s42, 0
          %s448 = scalar_select %p447, %s42, 0
          %s449 = scalar_lea.vmem %s8, %s448
        $region36: #{tpu_custom_call.1} parent=11 // pred_fallthru
          _
      $region12: #{tpu_custom_call.1} parent=5 // pred_fallthru
        _
      %p450 = scmp.lt.s32.totalorder %s31, 2
      // Predicated region
      $region37: #{tpu_custom_call.1} parent=5 // pred_check
        %p451 = pneg %p450
      $region38: #{tpu_custom_call.1} parent=5 // pred_check_branch
        %453 = sbr.rel (%p451) target = $region40
      $region39: #{tpu_custom_call.1} parent=5 // pred_region
        // Predicated region
        $region41: #{tpu_custom_call.1} parent=39 // pred_check
          %p454 = pneg %p72
        $region42: #{tpu_custom_call.1} parent=39 // pred_check_branch
          %456 = sbr.rel (%p454) target = $region44
        $region43: #{tpu_custom_call.1} parent=39 // pred_region
          %s457 = sand.u32 %s62, 1
          %s458 = scalar_lea.sflag [#allocation3], %s457
          %s459 = sand.u32 %s62, 1
          %s460 = smul.addr %s459, 4
          %s461 = scalar_lea.vmem [#allocation2], %s460
          %s463 = ssub.s32 64, 64
          %464 = vsyncadd %s458, %s463
          %s465 = sadd.s32 %s40, %s38
          %s466 = smul.addr %s465, 64
          %s467 = scalar_lea.hbm %s0, %s466
          %s469 = sshll.u32 %s461, 4
          %s470 = int_to_ptr.vmem [resolvable:$true] %s469
          %472 = dma.hbm_to_vmem [thread:$0]  %s467, 64, %s470, %s458
        $region44: #{tpu_custom_call.1} parent=39 // pred_fallthru
          _
        // Predicated region
        $region45: #{tpu_custom_call.1} parent=39 // pred_check
          %p473 = pneg %p100
        $region46: #{tpu_custom_call.1} parent=39 // pred_check_branch
          %475 = sbr.rel (%p473) target = $region48
        $region47: #{tpu_custom_call.1} parent=39 // pred_region
          %s476 = sand.u32 %s31, 1
          %s477 = scalar_lea.sflag [#allocation6], %s476
          %s478 = sand.u32 %s90, 1
          %s479 = smul.addr %s478, 4
          %s480 = scalar_lea.vmem [#allocation5], %s479
          %s482 = ssub.s32 64, 64
          %483 = vsyncadd %s477, %s482
          %s484 = sadd.s32 %s40, %s38
          %s485 = smul.addr %s484, 64
          %s486 = scalar_lea.hbm %s1, %s485
          %s488 = sshll.u32 %s480, 4
          %s489 = int_to_ptr.vmem [resolvable:$true] %s488
          %491 = dma.hbm_to_vmem [thread:$0]  %s486, 64, %s489, %s477
        $region48: #{tpu_custom_call.1} parent=39 // pred_fallthru
          _
        // Predicated region
        $region49: #{tpu_custom_call.1} parent=39 // pred_check
          %p492 = pneg %p128
        $region50: #{tpu_custom_call.1} parent=39 // pred_check_branch
          %494 = sbr.rel (%p492) target = $region52
        $region51: #{tpu_custom_call.1} parent=39 // pred_region
          %s495 = sand.u32 %s31, 1
          %s496 = scalar_lea.sflag [#allocation6], %s495
          %s497 = sand.u32 %s118, 1
          %s498 = smul.addr %s497, 4
          %s499 = scalar_lea.vmem [#allocation7], %s498
          %s501 = ssub.s32 64, 64
          %502 = vsyncadd %s496, %s501
          %s503 = sadd.s32 %s40, %s38
          %s504 = smul.addr %s503, 64
          %s505 = scalar_lea.hbm %s2, %s504
          %s507 = sshll.u32 %s499, 4
          %s508 = int_to_ptr.vmem [resolvable:$true] %s507
          %510 = dma.hbm_to_vmem [thread:$0]  %s505, 64, %s508, %s496
        $region52: #{tpu_custom_call.1} parent=39 // pred_fallthru
          _
      $region40: #{tpu_custom_call.1} parent=5 // pred_fallthru
        _
      %p511 = scmp.le.s32.totalorder 1, %s31
      %p512 = scmp.lt.s32.totalorder %s31, 3
      %p513 = pnand %p511, %p512
      %p514 = pneg %p513
      // Predicated region
      $region53: #{tpu_custom_call.1} parent=5 // pred_check
        _
      $region54: #{tpu_custom_call.1} parent=5 // pred_check_branch
        %516 = sbr.rel (%p513) target = $region56
      $region55: #{tpu_custom_call.1} parent=5 // pred_region
        %s517 = ssub.s32 %s31, 1
        %s518 = sand.u32 %s65, 1
        %s519 = scalar_lea.sflag [#allocation3], %s518
        %s520 = sand.u32 %s65, 1
        %s521 = smul.addr %s520, 4
        %s522 = scalar_lea.vmem [#allocation2], %s521
        // Predicated region
        $region57: #{tpu_custom_call.1} parent=55 // pred_check
          %p523 = pneg %p78
        $region58: #{tpu_custom_call.1} parent=55 // pred_check_branch
          %525 = sbr.rel (%p523) target = $region60
        $region59: #{tpu_custom_call.1} parent=55 // pred_region
          %526 = dma.done %s519, 64
        $region60: #{tpu_custom_call.1} parent=55 // pred_fallthru
          _
        %s527 = sand.u32 %s36, 1
        %s528 = scalar_lea.sflag [#allocation6], %s527
        %s529 = sand.u32 %s93, 1
        %s530 = smul.addr %s529, 4
        %s531 = scalar_lea.vmem [#allocation5], %s530
        // Predicated region
        $region61: #{tpu_custom_call.1} parent=55 // pred_check
          %p532 = pneg %p106
        $region62: #{tpu_custom_call.1} parent=55 // pred_check_branch
          %534 = sbr.rel (%p532) target = $region64
        $region63: #{tpu_custom_call.1} parent=55 // pred_region
          %535 = dma.done %s528, 64
        $region64: #{tpu_custom_call.1} parent=55 // pred_fallthru
          _
        %s536 = sand.u32 %s36, 1
        %s537 = scalar_lea.sflag [#allocation6], %s536
        %s538 = sand.u32 %s121, 1
        %s539 = smul.addr %s538, 4
        %s540 = scalar_lea.vmem [#allocation7], %s539
        // Predicated region
        $region65: #{tpu_custom_call.1} parent=55 // pred_check
          %p541 = pneg %p134
        $region66: #{tpu_custom_call.1} parent=55 // pred_check_branch
          %543 = sbr.rel (%p541) target = $region68
        $region67: #{tpu_custom_call.1} parent=55 // pred_region
          %544 = dma.done %s537, 64
        $region68: #{tpu_custom_call.1} parent=55 // pred_fallthru
          _
        // Predicated region
        $region69: #{tpu_custom_call.1} parent=55 // pred_check
          %p545 = pneg %p160
        $region70: #{tpu_custom_call.1} parent=55 // pred_check_branch
          %547 = sbr.rel (%p545) target = $region72
        $region71: #{tpu_custom_call.1} parent=55 // pred_region
          %548 = dma.done [#allocation9], 256
        $region72: #{tpu_custom_call.1} parent=55 // pred_fallthru
          _
        // Predicated region
        $region73: #{tpu_custom_call.1} parent=55 // pred_check
          %p549 = pneg %p264
        $region74: #{tpu_custom_call.1} parent=55 // pred_check_branch
          %551 = sbr.rel (%p549) target = $region76
        $region75: #{tpu_custom_call.1} parent=55 // pred_region
          %552 = dma.done [#allocation9], 256
        $region76: #{tpu_custom_call.1} parent=55 // pred_fallthru
          _
        %s553 = sand.u32 %s65, 1
        %s554 = scalar_lea.sflag [#allocation3], %s553
        %s555 = sand.u32 %s65, 1
        %s556 = smul.addr %s555, 4
        %s557 = scalar_lea.vmem [#allocation2], %s556
        %p558 = pneg %p78
        %p559 = pneg %p75
        %s560 = sand.u32 %s36, 1
        %s561 = scalar_lea.sflag [#allocation6], %s560
        %s562 = sand.u32 %s93, 1
        %s563 = smul.addr %s562, 4
        %s564 = scalar_lea.vmem [#allocation5], %s563
        %p565 = pneg %p106
        %p566 = pneg %p103
        %s567 = sand.u32 %s36, 1
        %s568 = scalar_lea.sflag [#allocation6], %s567
        %s569 = sand.u32 %s121, 1
        %s570 = smul.addr %s569, 4
        %s571 = scalar_lea.vmem [#allocation7], %s570
        %p572 = pneg %p134
        %p573 = pneg %p131
        %p574 = pneg %p160
        %p575 = pneg %p157
        %p576 = scmp.lt.s32.totalorder %s42, 0
        %s577 = scalar_select %p576, %s42, 0
        %s578 = scalar_lea.vmem %s4, %s577
        %p579 = pneg %p186
        %p580 = pneg %p183
        %p581 = scmp.lt.s32.totalorder %s42, 0
        %s582 = scalar_select %p581, %s42, 0
        %s583 = smul.addr %s582, 4
        %s584 = scalar_lea.vmem %s5, %s583
        %p585 = pneg %p212
        %p586 = pneg %p209
        %p587 = scmp.lt.s32.totalorder %s42, 0
        %s588 = scalar_select %p587, %s42, 0
        %s589 = scalar_lea.vmem %s6, %s588
        %p590 = pneg %p238
        %p591 = pneg %p235
        %p592 = pneg %p264
        %p593 = pneg %p261
        %p594 = scmp.lt.s32.totalorder %s42, 0
        %s595 = scalar_select %p594, %s42, 0
        %s596 = scalar_lea.vmem %s8, %s595
        %p597 = pneg %p290
        %p598 = pneg %p287
        %p599 = pneg %p320
        %p600 = pneg %p317
        %s601 = sand.u32 %s307, 1
        %s602 = scalar_lea.sflag [#allocation4], %s601
        %s603 = sand.u32 %s307, 1
        %s604 = smul.addr %s603, 16
        %s605 = scalar_lea.vmem [#allocation11], %s604
        %p606 = pneg %p350
        %p607 = pneg %p347
        %s608 = sand.u32 %s36, 1
        %s609 = scalar_lea.sflag [#allocation13], %s608
        %s610 = sand.u32 %s337, 1
        %s611 = smul.addr %s610, 16
        %s612 = scalar_lea.vmem [#allocation12], %s611
        %p613 = pneg %p380
        %p614 = pneg %p377
        %s615 = sand.u32 %s36, 1
        %s616 = scalar_lea.sflag [#allocation13], %s615
        %s617 = sand.u32 %s367, 1
        %s618 = smul.addr %s617, 16
        %s619 = scalar_lea.vmem [#allocation14], %s618
        %p620 = scmp.lt.s32.totalorder %s42, 0
        %s621 = scalar_select %p620, %s42, 0
        %s622 = scalar_lea.vmem %s4, %s621
        %p623 = scmp.lt.s32.totalorder %s42, 0
        %s624 = scalar_select %p623, %s42, 0
        %s625 = smul.addr %s624, 4
        %s626 = scalar_lea.vmem %s5, %s625
        %p627 = scmp.lt.s32.totalorder %s42, 0
        %s628 = scalar_select %p627, %s42, 0
        %s629 = scalar_lea.vmem %s6, %s628
        %p630 = scmp.lt.s32.totalorder %s42, 0
        %s631 = scalar_select %p630, %s42, 0
        %s632 = scalar_lea.vmem %s8, %s631
        %s633 = smul.u32 4, %s42
        %s634 = smul.u32 4, %s42
        %s635 = smul.u32 4, %s42
        %v637 = vld [vmem:[%s522] sm:$0xf]
        %v638 = vld [vmem:[#allocation8] sm:$0xf]
        %v639 = vld [vmem:[#allocation8 + $0x4] sm:$0xf]
        %v640 = vld [vmem:[#allocation8 + $0x8] sm:$0xf]
        %v641 = vld [vmem:[#allocation8 + $0xc] sm:$0xf]
        %v642 = vld [vmem:[%s622] sm:$0x1]
        %v644 = vlaneseq
        %v645 = vshrl.u32 %v644, 7
        %v646 = vsub.s32 0, %v645
        %v647 = vrot.slane %v642, %v646
        %v653 = vunpack.c.l.b16 %v638
        %v654 = vunpack.c.l.b16 %v639
        %v655 = vunpack.c.l.b16 %v640
        %v656 = vunpack.c.l.b16 %v641
        %v657 = vpack.c.b16 %v654, %v653
        %v658 = vpack.c.b16 %v656, %v655
        %vm661 = vcmask 261120
        %v663 = vsel %vm661, %v637, 0
        %665 = vmatprep.subr.bf16.mxu0 0
        %666 = vmatpush1.bf16.msra.mxu0 %v657
        %667 = vmatprep.subr.bf16.mxu0 0
        %668 = vmatpush1.bf16.msra.mxu0 %v658
        %669 = vmatprep.subr.bf16.mxu0 0
        %670 = vmatpush1.bf16.msra.mxu0 0
        %671 = vmatprep.subr.bf16.mxu0 0
        %672 = vmatpush1.bf16.msra.mxu0 0
        %673 = vmatprep.subr.bf16.mxu0 0
        %674 = vmatpush1.bf16.msra.mxu0 0
        %675 = vmatprep.subr.bf16.mxu0 0
        %676 = vmatpush1.bf16.msra.mxu0 0
        %677 = vmatprep.subr.bf16.mxu0 0
        %678 = vmatpush1.bf16.msra.mxu0 0
        %679 = vmatprep.subr.bf16.mxu0 0
        %680 = vmatpush1.bf16.msra.mxu0 0
        %681 = vmatprep.subr.bf16.mxu0 0
        %682 = vmatpush1.bf16.msra.mxu0 0
        %683 = vmatprep.subr.bf16.mxu0 0
        %684 = vmatpush1.bf16.msra.mxu0 0
        %685 = vmatprep.subr.bf16.mxu0 0
        %686 = vmatpush1.bf16.msra.mxu0 0
        %687 = vmatprep.subr.bf16.mxu0 0
        %688 = vmatpush1.bf16.msra.mxu0 0
        %689 = vmatprep.subr.bf16.mxu0 0
        %690 = vmatpush1.bf16.msra.mxu0 0
        %691 = vmatprep.subr.bf16.mxu0 0
        %692 = vmatpush1.bf16.msra.mxu0 0
        %693 = vmatprep.subr.bf16.mxu0 0
        %694 = vmatpush1.bf16.msra.mxu0 0
        %695 = vmatprep.subr.bf16.mxu0 0
        %696 = vmatpush1.bf16.msra.mxu0 0
        %697 = vmatprep.mubr.bf16.mxu0 0
        %698 = vmatmul.mubr.bf16.gmra.mrb[0].mxu0 %v663
        %v699 = vpop.f32.mrb[0].mxu0
        %v700 = vadd.f32 %v647, %v699
        %v701 = vpop.f32.mrb[0].mxu0
        %v702 = vpop.f32.mrb[0].mxu0
        %v703 = vpop.f32.mrb[0].mxu0
        %704 = vdwg.mxu0
        %v705 = vmul.f32 %v700, 0.35355338
        %v706 = vpack.c.bf16 %v705, %v705
        %vm707 = vcmask 60416
        %708 = vst.msk [vmem:[%s605] sm:$0xf] %vm707, %v706
        %v710 = vunpack.c.l.b16 %v706
        %v711 = vpack.c.b16 %v710, %v710
        %712 = vrot.lane.b32.xlu0 %v711, 120
        %v713 = vpop.permute.xlu0 %712
        %s715 = scalar_lea.vmem %s605, 4 [#allocation11]
        %716 = vst.msk [vmem:[%s715] sm:$0xf] %vm707, %v713
        %717 = vrot.lane.b32.xlu0 %v711, 112
        %v718 = vpop.permute.xlu0 %717
        %s720 = scalar_lea.vmem %s605, 8 [#allocation11]
        %721 = vst.msk [vmem:[%s720] sm:$0xf] %vm707, %v718
        %722 = vrot.lane.b32.xlu0 %v711, 104
        %v723 = vpop.permute.xlu0 %722
        %s725 = scalar_lea.vmem %s605, 12 [#allocation11]
        %726 = vst.msk [vmem:[%s725] sm:$0xf] %vm707, %v723
        %v727 = vld [vmem:[%s531] sm:$0xf]
        %v728 = vld [vmem:[%s626] sm:$0xf]
        %v729 = vld [vmem:[%s626 + $0x4] sm:$0xf]
        %v730 = vld [vmem:[%s626 + $0x8] sm:$0xf]
        %v731 = vld [vmem:[%s626 + $0xc] sm:$0xf]
        %v732 = vld [vmem:[%s629] sm:$0x1]
        %v734 = vlaneseq
        %v735 = vshrl.u32 %v734, 7
        %v736 = vsub.s32 0, %v735
        %v737 = vrot.slane %v732, %v736
        %v743 = vunpack.c.l.b16 %v728
        %v744 = vunpack.c.l.b16 %v729
        %v745 = vunpack.c.l.b16 %v730
        %v746 = vunpack.c.l.b16 %v731
        %v747 = vpack.c.b16 %v744, %v743
        %v748 = vpack.c.b16 %v746, %v745
        %v752 = vsel %vm661, %v727, 0
        %754 = vmatprep.subr.bf16.mxu0 0
        %755 = vmatpush1.bf16.msra.mxu0 %v747
        %756 = vmatprep.subr.bf16.mxu0 0
        %757 = vmatpush1.bf16.msra.mxu0 %v748
        %758 = vmatprep.subr.bf16.mxu0 0
        %759 = vmatpush1.bf16.msra.mxu0 0
        %760 = vmatprep.subr.bf16.mxu0 0
        %761 = vmatpush1.bf16.msra.mxu0 0
        %762 = vmatprep.subr.bf16.mxu0 0
        %763 = vmatpush1.bf16.msra.mxu0 0
        %764 = vmatprep.subr.bf16.mxu0 0
        %765 = vmatpush1.bf16.msra.mxu0 0
        %766 = vmatprep.subr.bf16.mxu0 0
        %767 = vmatpush1.bf16.msra.mxu0 0
        %768 = vmatprep.subr.bf16.mxu0 0
        %769 = vmatpush1.bf16.msra.mxu0 0
        %770 = vmatprep.subr.bf16.mxu0 0
        %771 = vmatpush1.bf16.msra.mxu0 0
        %772 = vmatprep.subr.bf16.mxu0 0
        %773 = vmatpush1.bf16.msra.mxu0 0
        %774 = vmatprep.subr.bf16.mxu0 0
        %775 = vmatpush1.bf16.msra.mxu0 0
        %776 = vmatprep.subr.bf16.mxu0 0
        %777 = vmatpush1.bf16.msra.mxu0 0
        %778 = vmatprep.subr.bf16.mxu0 0
        %779 = vmatpush1.bf16.msra.mxu0 0
        %780 = vmatprep.subr.bf16.mxu0 0
        %781 = vmatpush1.bf16.msra.mxu0 0
        %782 = vmatprep.subr.bf16.mxu0 0
        %783 = vmatpush1.bf16.msra.mxu0 0
        %784 = vmatprep.subr.bf16.mxu0 0
        %785 = vmatpush1.bf16.msra.mxu0 0
        %786 = vmatprep.mubr.bf16.mxu0 0
        %787 = vmatmul.mubr.bf16.gmra.mrb[0].mxu0 %v752
        %v788 = vpop.f32.mrb[0].mxu0
        %v789 = vadd.f32 %v737, %v788
        %v790 = vpop.f32.mrb[0].mxu0
        %v791 = vpop.f32.mrb[0].mxu0
        %v792 = vpop.f32.mrb[0].mxu0
        %793 = vdwg.mxu0
        %v794 = vpack.c.bf16 %v789, %v789
        %795 = vst.msk [vmem:[%s612] sm:$0xf] %vm707, %v794
        %v797 = vunpack.c.l.b16 %v794
        %v798 = vpack.c.b16 %v797, %v797
        %799 = vrot.lane.b32.xlu0 %v798, 120
        %v800 = vpop.permute.xlu0 %799
        %s802 = scalar_lea.vmem %s612, 4 [#allocation12]
        %803 = vst.msk [vmem:[%s802] sm:$0xf] %vm707, %v800
        %804 = vrot.lane.b32.xlu0 %v798, 112
        %v805 = vpop.permute.xlu0 %804
        %s807 = scalar_lea.vmem %s612, 8 [#allocation12]
        %808 = vst.msk [vmem:[%s807] sm:$0xf] %vm707, %v805
        %809 = vrot.lane.b32.xlu0 %v798, 104
        %v810 = vpop.permute.xlu0 %809
        %s812 = scalar_lea.vmem %s612, 12 [#allocation12]
        %813 = vst.msk [vmem:[%s812] sm:$0xf] %vm707, %v810
        %v814 = vld [vmem:[%s540] sm:$0xf]
        %v815 = vld [vmem:[#allocation10] sm:$0xf]
        %v816 = vld [vmem:[#allocation10 + $0x4] sm:$0xf]
        %v817 = vld [vmem:[#allocation10 + $0x8] sm:$0xf]
        %v818 = vld [vmem:[#allocation10 + $0xc] sm:$0xf]
        %v819 = vld [vmem:[%s632] sm:$0x1]
        %v821 = vlaneseq
        %v822 = vshrl.u32 %v821, 7
        %v823 = vsub.s32 0, %v822
        %v824 = vrot.slane %v819, %v823
        %v830 = vunpack.c.l.b16 %v815
        %v831 = vunpack.c.l.b16 %v816
        %v832 = vunpack.c.l.b16 %v817
        %v833 = vunpack.c.l.b16 %v818
        %v834 = vpack.c.b16 %v831, %v830
        %v835 = vpack.c.b16 %v833, %v832
        %v839 = vsel %vm661, %v814, 0
        %841 = vmatprep.subr.bf16.mxu0 0
        %842 = vmatpush1.bf16.msra.mxu0 %v834
        %843 = vmatprep.subr.bf16.mxu0 0
        %844 = vmatpush1.bf16.msra.mxu0 %v835
        %845 = vmatprep.subr.bf16.mxu0 0
        %846 = vmatpush1.bf16.msra.mxu0 0
        %847 = vmatprep.subr.bf16.mxu0 0
        %848 = vmatpush1.bf16.msra.mxu0 0
        %849 = vmatprep.subr.bf16.mxu0 0
        %850 = vmatpush1.bf16.msra.mxu0 0
        %851 = vmatprep.subr.bf16.mxu0 0
        %852 = vmatpush1.bf16.msra.mxu0 0
        %853 = vmatprep.subr.bf16.mxu0 0
        %854 = vmatpush1.bf16.msra.mxu0 0
        %855 = vmatprep.subr.bf16.mxu0 0
        %856 = vmatpush1.bf16.msra.mxu0 0
        %857 = vmatprep.subr.bf16.mxu0 0
        %858 = vmatpush1.bf16.msra.mxu0 0
        %859 = vmatprep.subr.bf16.mxu0 0
        %860 = vmatpush1.bf16.msra.mxu0 0
        %861 = vmatprep.subr.bf16.mxu0 0
        %862 = vmatpush1.bf16.msra.mxu0 0
        %863 = vmatprep.subr.bf16.mxu0 0
        %864 = vmatpush1.bf16.msra.mxu0 0
        %865 = vmatprep.subr.bf16.mxu0 0
        %866 = vmatpush1.bf16.msra.mxu0 0
        %867 = vmatprep.subr.bf16.mxu0 0
        %868 = vmatpush1.bf16.msra.mxu0 0
        %869 = vmatprep.subr.bf16.mxu0 0
        %870 = vmatpush1.bf16.msra.mxu0 0
        %871 = vmatprep.subr.bf16.mxu0 0
        %872 = vmatpush1.bf16.msra.mxu0 0
        %873 = vmatprep.mubr.bf16.mxu0 0
        %874 = vmatmul.mubr.bf16.gmra.mrb[0].mxu0 %v839
        %v875 = vpop.f32.mrb[0].mxu0
        %v876 = vadd.f32 %v824, %v875
        %v877 = vpop.f32.mrb[0].mxu0
        %v878 = vpop.f32.mrb[0].mxu0
        %v879 = vpop.f32.mrb[0].mxu0
        %880 = vdwg.mxu0
        %v881 = vpack.c.bf16 %v876, %v876
        %882 = vst.msk [vmem:[%s619] sm:$0xf] %vm707, %v881
        %v884 = vunpack.c.l.b16 %v881
        %v885 = vpack.c.b16 %v884, %v884
        %886 = vrot.lane.b32.xlu0 %v885, 120
        %v887 = vpop.permute.xlu0 %886
        %s889 = scalar_lea.vmem %s619, 4 [#allocation14]
        %890 = vst.msk [vmem:[%s889] sm:$0xf] %vm707, %v887
        %891 = vrot.lane.b32.xlu0 %v885, 112
        %v892 = vpop.permute.xlu0 %891
        %s894 = scalar_lea.vmem %s619, 8 [#allocation14]
        %895 = vst.msk [vmem:[%s894] sm:$0xf] %vm707, %v892
        %896 = vrot.lane.b32.xlu0 %v885, 104
        %v897 = vpop.permute.xlu0 %896
        %s899 = scalar_lea.vmem %s619, 12 [#allocation14]
        %900 = vst.msk [vmem:[%s899] sm:$0xf] %vm707, %v897
        %s901 = sand.u32 %s307, 1
        %s902 = scalar_lea.sflag [#allocation4], %s901
        %s903 = sand.u32 %s307, 1
        %s904 = smul.addr %s903, 16
        %s905 = scalar_lea.vmem [#allocation11], %s904
        %s906 = sand.u32 %s36, 1
        %s907 = scalar_lea.sflag [#allocation13], %s906
        %s908 = sand.u32 %s337, 1
        %s909 = smul.addr %s908, 16
        %s910 = scalar_lea.vmem [#allocation12], %s909
        %s911 = sand.u32 %s36, 1
        %s912 = scalar_lea.sflag [#allocation13], %s911
        %s913 = sand.u32 %s367, 1
        %s914 = smul.addr %s913, 16
        %s915 = scalar_lea.vmem [#allocation14], %s914
        // Predicated region
        $region77: #{tpu_custom_call.1} parent=55 // pred_check
          %p916 = pneg %p317
        $region78: #{tpu_custom_call.1} parent=55 // pred_check_branch
          %918 = sbr.rel (%p916) target = $region80
        $region79: #{tpu_custom_call.1} parent=55 // pred_region
          %s919 = smul.u32 4, %s42
          %s921 = ssub.s32 256, 256
          %922 = vsyncadd %s902, %s921
          %s923 = sadd.s32 %s43, %s919
          %s924 = smul.addr %s41, 4
          %s925 = sadd.s32 %s923, %s924
          %s926 = smul.addr %s925, 64
          %s927 = scalar_lea.hbm %s9, %s926
          %s928 = sshll.u32 %s905, 4
          %s929 = int_to_ptr.vmem [resolvable:$true] %s928
          %934 = dma.vmem_to_hbm [thread:$0]  %s929, 256, %s927, %s902, 64, 64, 4
        $region80: #{tpu_custom_call.1} parent=55 // pred_fallthru
          _
        // Predicated region
        $region81: #{tpu_custom_call.1} parent=55 // pred_check
          %p935 = pneg %p347
        $region82: #{tpu_custom_call.1} parent=55 // pred_check_branch
          %937 = sbr.rel (%p935) target = $region84
        $region83: #{tpu_custom_call.1} parent=55 // pred_region
          %s938 = smul.u32 4, %s42
          %s940 = ssub.s32 256, 256
          %941 = vsyncadd %s907, %s940
          %s942 = sadd.s32 %s43, %s938
          %s943 = smul.addr %s41, 4
          %s944 = sadd.s32 %s942, %s943
          %s945 = smul.addr %s944, 64
          %s946 = scalar_lea.hbm %s10, %s945
          %s947 = sshll.u32 %s910, 4
          %s948 = int_to_ptr.vmem [resolvable:$true] %s947
          %953 = dma.vmem_to_hbm [thread:$0]  %s948, 256, %s946, %s907, 64, 64, 4
        $region84: #{tpu_custom_call.1} parent=55 // pred_fallthru
          _
        // Predicated region
        $region85: #{tpu_custom_call.1} parent=55 // pred_check
          %p954 = pneg %p377
        $region86: #{tpu_custom_call.1} parent=55 // pred_check_branch
          %956 = sbr.rel (%p954) target = $region88
        $region87: #{tpu_custom_call.1} parent=55 // pred_region
          %s957 = smul.u32 4, %s42
          %s959 = ssub.s32 256, 256
          %960 = vsyncadd %s912, %s959
          %s961 = sadd.s32 %s43, %s957
          %s962 = smul.addr %s41, 4
          %s963 = sadd.s32 %s961, %s962
          %s964 = smul.addr %s963, 64
          %s965 = scalar_lea.hbm %s11, %s964
          %s966 = sshll.u32 %s915, 4
          %s967 = int_to_ptr.vmem [resolvable:$true] %s966
          %972 = dma.vmem_to_hbm [thread:$0]  %s967, 256, %s965, %s912, 64, 64, 4
        $region88: #{tpu_custom_call.1} parent=55 // pred_fallthru
          _
      $region56: #{tpu_custom_call.1} parent=5 // pred_fallthru
        _
      %p973 = scmp.le.s32.totalorder 2, %s31
      // Predicated region
      $region89: #{tpu_custom_call.1} parent=5 // pred_check
        %p974 = pneg %p973
      $region90: #{tpu_custom_call.1} parent=5 // pred_check_branch
        %976 = sbr.rel (%p974) target = $region92
      $region91: #{tpu_custom_call.1} parent=5 // pred_region
        %s977 = ssub.s32 %s31, 2
        // Predicated region
        $region93: #{tpu_custom_call.1} parent=91 // pred_check
          %p978 = pneg %p323
        $region94: #{tpu_custom_call.1} parent=91 // pred_check_branch
          %980 = sbr.rel (%p978) target = $region96
        $region95: #{tpu_custom_call.1} parent=91 // pred_region
          %s981 = sand.u32 %s308, 1
          %s982 = scalar_lea.sflag [#allocation4], %s981
          %s983 = sand.u32 %s308, 1
          %s984 = smul.addr %s983, 16
          %s985 = scalar_lea.vmem [#allocation11], %s984
          %986 = dma.done %s982, 256
        $region96: #{tpu_custom_call.1} parent=91 // pred_fallthru
          _
        // Predicated region
        $region97: #{tpu_custom_call.1} parent=91 // pred_check
          %p987 = pneg %p353
        $region98: #{tpu_custom_call.1} parent=91 // pred_check_branch
          %989 = sbr.rel (%p987) target = $region100
        $region99: #{tpu_custom_call.1} parent=91 // pred_region
          %s990 = sand.u32 %s37, 1
          %s991 = scalar_lea.sflag [#allocation13], %s990
          %s992 = sand.u32 %s338, 1
          %s993 = smul.addr %s992, 16
          %s994 = scalar_lea.vmem [#allocation12], %s993
          %995 = dma.done %s991, 256
        $region100: #{tpu_custom_call.1} parent=91 // pred_fallthru
          _
        // Predicated region
        $region101: #{tpu_custom_call.1} parent=91 // pred_check
          %p996 = pneg %p383
        $region102: #{tpu_custom_call.1} parent=91 // pred_check_branch
          %998 = sbr.rel (%p996) target = $region104
        $region103: #{tpu_custom_call.1} parent=91 // pred_region
          %s999 = sand.u32 %s37, 1
          %s1000 = scalar_lea.sflag [#allocation13], %s999
          %s1001 = sand.u32 %s368, 1
          %s1002 = smul.addr %s1001, 16
          %s1003 = scalar_lea.vmem [#allocation14], %s1002
          %1004 = dma.done %s1000, 256
        $region104: #{tpu_custom_call.1} parent=91 // pred_fallthru
          _
      $region92: #{tpu_custom_call.1} parent=5 // pred_fallthru
        _
    $region6: #{tpu_custom_call.1} parent=1 // loop_footer
      %s35 = sadd.s32 1, %s31
    $region7: #{tpu_custom_call.1} parent=1 // loop_footer_branch
      %30 = sbr.rel target = $region3
    $region8: #{tpu_custom_call.1} parent=1 // loop_exit
      _
    %1005 = vsyncpa [#allocation3], 1
    %s1006 = scalar_lea.sflag [#allocation3], 1
    %1007 = vsyncpa %s1006, 1
    %1008 = vsyncpa [#allocation6], 1
    %s1009 = scalar_lea.sflag [#allocation6], 1
    %1010 = vsyncpa %s1009, 1
    %1011 = vsyncpa [#allocation9], 1
    %1012 = vsyncpa [#allocation4], 1
    %s1013 = scalar_lea.sflag [#allocation4], 1
    %1014 = vsyncpa %s1013, 1
    %1015 = vsyncpa [#allocation13], 1
    %s1016 = scalar_lea.sflag [#allocation13], 1
    %1017 = vsyncpa %s1016, 1

</llo_original>
